<compile_context>
chip_gen: v6e
topology: v6e:2x2x1
jax: 0.10.0
libtpu: 0.0.40
codegen_flags: <defaults>
</compile_context>

<pallas_src>
import jax
import jax.numpy as jnp
from jax.experimental import pallas as pl
from jax.experimental.pallas import tpu as pltpu

RANK = 242  # matches module-level `rank = 242` in model_new.py

_LANE = 128
_VMEM_BUDGET = 32 * 1024 * 1024  # conservative budget; fits v7x (64 MiB phys)


def _round_up(x, m):
    return ((x + m - 1) // m) * m


def _sublane(dtype):
    # f32 -> 8-row sublane multiple, bf16/fp16 -> 16 (packed sublanes).
    return 8 if jnp.dtype(dtype).itemsize >= 4 else 16


def _factorized_linear_kernel(x_ref, w1_ref, w2_ref, o_ref):
    # x_ref : (tm, in_pad)        VMEM tile of flattened, zero-padded inputs
    # w1_ref: (in_pad, rank_pad)  resident W_low^T  (zero-padded)
    # w2_ref: (rank_pad, out_pad) resident W_high^T (zero-padded)
    # o_ref : (tm, out_pad)
    t = jnp.dot(x_ref[...], w1_ref[...], preferred_element_type=jnp.float32)
    # bf16 weights -> bf16 second matmul (fast MXU path); f32 stays f32.
    t = t.astype(w2_ref.dtype)
    y = jnp.dot(t, w2_ref[...], preferred_element_type=jnp.float32)
    o_ref[...] = y.astype(o_ref.dtype)


def prepare_weights(w_low, w_high, dtype=None):
    """One-time glue: transpose + zero-pad weights to lane-dense shapes.

    w_low: (rank, in_features), w_high: (out_features, rank) (nn.Linear layout).
    Returns (w1t_pad, w2t_pad, out_features) with
      w1t_pad: (in_pad, rank_pad), w2t_pad: (rank_pad, out_pad).
    """
    rank, in_features = w_low.shape
    out_features, rank2 = w_high.shape
    assert rank == rank2, (w_low.shape, w_high.shape)
    if dtype is None:
        dtype = w_low.dtype

    in_pad = _round_up(in_features, _LANE)
    rank_pad = _round_up(rank, _LANE)
    out_pad = _round_up(out_features, _LANE)

    w1t = w_low.T.astype(dtype)   # (in_features, rank)
    w2t = w_high.T.astype(dtype)  # (rank, out_features)
    if (in_pad, rank_pad) != w1t.shape:
        w1t = jnp.zeros((in_pad, rank_pad), dtype).at[:in_features, :rank].set(w1t)
    if (rank_pad, out_pad) != w2t.shape:
        w2t = jnp.zeros((rank_pad, out_pad), dtype).at[:rank, :out_features].set(w2t)
    return w1t, w2t, out_features


def _vmem_bytes(tm, in_pad, rank_pad, out_pad, itemsize):
    # Double-buffered x/out tiles + (conservatively double-buffered) weights
    # + f32 intermediates.
    x_buf = 2 * tm * in_pad * itemsize
    o_buf = 2 * tm * out_pad * itemsize
    w_buf = 2 * (in_pad * rank_pad + rank_pad * out_pad) * itemsize
    interm = tm * rank_pad * 4 + tm * out_pad * 4
    return x_buf + o_buf + w_buf + interm


def _pick_tm(M, in_pad, rank_pad, out_pad, dtype, requested):
    sub = _sublane(dtype)
    itemsize = jnp.dtype(dtype).itemsize
    tm = 512 if requested is None else _round_up(requested, sub)
    tm = max(sub, min(tm, _round_up(M, sub)))
    # Shrink until the tile set fits the VMEM budget (matters for huge in/out).
    while tm > sub and _vmem_bytes(tm, in_pad, rank_pad, out_pad, itemsize) > _VMEM_BUDGET:
        tm = max(sub, _round_up(tm // 2, sub))
    return tm


def _build_call(M_pad, tm, in_pad, rank_pad, out_pad, dtype, single_buffer_weights):
    w_kwargs = {}
    if single_buffer_weights:
        # Weight index_maps are constant across grid steps; a second pipeline
        # buffer would be pure VMEM waste.
        w_kwargs = dict(pipeline_mode=pl.Buffered(1))

    itemsize = jnp.dtype(dtype).itemsize
    flops = 2 * M_pad * in_pad * rank_pad + 2 * M_pad * rank_pad * out_pad
    bytes_accessed = itemsize * (
        M_pad * in_pad + in_pad * rank_pad + rank_pad * out_pad + M_pad * out_pad)
    vmem_limit = min(
        _VMEM_BUDGET + (16 << 20),
        max(16 << 20,
            _vmem_bytes(tm, in_pad, rank_pad, out_pad, itemsize) + (4 << 20)),
    )

    return pl.pallas_call(
        _factorized_linear_kernel,
        out_shape=jax.ShapeDtypeStruct((M_pad, out_pad), dtype),
        grid_spec=pltpu.PrefetchScalarGridSpec(
            num_scalar_prefetch=0,
            grid=(M_pad // tm,),
            in_specs=[
                pl.BlockSpec((tm, in_pad), lambda i: (i, 0)),
                pl.BlockSpec((in_pad, rank_pad), lambda i: (0, 0), **w_kwargs),
                pl.BlockSpec((rank_pad, out_pad), lambda i: (0, 0), **w_kwargs),
            ],
            out_specs=pl.BlockSpec((tm, out_pad), lambda i: (i, 0)),
        ),
        compiler_params=pltpu.CompilerParams(
            dimension_semantics=("parallel",),
            vmem_limit_bytes=vmem_limit,
        ),
        cost_estimate=pl.CostEstimate(
            flops=flops, transcendentals=0, bytes_accessed=bytes_accessed),
    )


def factorized_linear_prepared(x, w1t_pad, w2t_pad, out_features, *, tm=None):
    """Hot path: weights already transposed + padded by prepare_weights()."""
    in_features = x.shape[-1]
    in_pad, rank_pad = w1t_pad.shape
    rank_pad2, out_pad = w2t_pad.shape
    assert rank_pad == rank_pad2
    assert in_features <= in_pad

    lead_shape = x.shape[:-1]
    x2d = x.reshape(-1, in_features)
    M = x2d.shape[0]

    tm = _pick_tm(M, in_pad, rank_pad, out_pad, x.dtype, tm)
    n_steps = pl.cdiv(M, tm)
    M_pad = n_steps * tm

    # Zero-pad rows (M % tm remainder) and the feature axis to the lane-dense
    # kernel shapes; zeros are math-preserving (padded weight regions are zero).
    if M_pad == M and in_pad == in_features:
        x2d_pad = x2d
    else:
        x2d_pad = jnp.zeros((M_pad, in_pad), x.dtype).at[:M, :in_features].set(x2d)

    try:
        out = _build_call(M_pad, tm, in_pad, rank_pad, out_pad, x.dtype, True)(
            x2d_pad, w1t_pad, w2t_pad)
    except Exception:
        # Fallback if pipeline_mode=pl.Buffered(1) is rejected by this build.
        out = _build_call(M_pad, tm, in_pad, rank_pad, out_pad, x.dtype, False)(
            x2d_pad, w1t_pad, w2t_pad)

    out = out[:M, :out_features]
    return out.reshape(*lead_shape, out_features)


def factorized_linear(x, w_low, w_high, *, tm=None):
    """Convenience wrapper taking raw nn.Linear-layout weights."""
    w1t_pad, w2t_pad, out_features = prepare_weights(w_low, w_high, dtype=x.dtype)
    return factorized_linear_prepared(x, w1t_pad, w2t_pad, out_features, tm=tm)


if __name__ == "__main__":
    key = jax.random.PRNGKey(0)
    k_x, k_w1, k_w2 = jax.random.split(key, 3)

    batch, seq = 2, 8
    in_features, out_features = 32, 48

    x = jax.random.normal(k_x, (batch, seq, in_features), dtype=jnp.float32)
    # Deterministic synthetic weights (shapes match nn.Linear: [out, in]).
    w_low = jax.random.normal(k_w1, (RANK, in_features), dtype=jnp.float32) * 0.05
    w_high = jax.random.normal(k_w2, (out_features, RANK), dtype=jnp.float32) * 0.05

    # Hoisted one-time weight prep (transpose + zero-pad to 128-lane multiples).
    w1t_pad, w2t_pad, out_f = prepare_weights(w_low, w_high)

    y = factorized_linear_prepared(x, w1t_pad, w2t_pad, out_f)
    y = jax.block_until_ready(y)

    # Reference check in plain JAX (same math as the PyTorch forward).
    y_ref = (x @ w_low.T) @ w_high.T
    assert y.shape == (batch, seq, out_features)
    assert jnp.allclose(y, y_ref, atol=1e-4, rtol=1e-4), "mismatch vs reference"

    # Also exercise the convenience wrapper + M % tm remainder handling
    # (10 rows with tm=8 -> grid of 2 steps, padded tail).
    x_tail = jax.random.normal(k_x, (10, in_features), dtype=jnp.float32)
    y_tail = jax.block_until_ready(factorized_linear(x_tail, w_low, w_high, tm=8))
    y_tail_ref = (x_tail @ w_low.T) @ w_high.T
    assert jnp.allclose(y_tail, y_tail_ref, atol=1e-4, rtol=1e-4), "tail mismatch"

    print("KERNEL_OK")
</pallas_src>

<mosaic_0001>
module attributes {stable_mosaic.version = 11 : i64} {
  func.func @_factorized_linear_kernel(%arg0: i32, %arg1: memref<16x128xf32, #tpu.memory_space<vmem>>, %arg2: memref<128x256xf32, #tpu.memory_space<vmem>>, %arg3: memref<256x128xf32, #tpu.memory_space<vmem>>, %arg4: memref<16x128xf32, #tpu.memory_space<vmem>>) attributes {dimension_semantics = [#tpu.dimension_semantics<parallel>], iteration_bounds = array<i64: 1>, scalar_prefetch = 0 : i64, scratch_operands = 0 : i64, tpu.core_type = #tpu.core_type<tc>, window_params = [{transform_indices = @transform_0, window_bounds = array<i64: 16, 128>}, {pipeline_mode = #tpu.pipeline_mode<synchronous>, transform_indices = @transform_1, window_bounds = array<i64: 128, 256>}, {pipeline_mode = #tpu.pipeline_mode<synchronous>, transform_indices = @transform_2, window_bounds = array<i64: 256, 128>}, {transform_indices = @transform_3, window_bounds = array<i64: 16, 128>}]} {
    %c0 = arith.constant 0 : index
    %c0_0 = arith.constant 0 : index
    %0 = vector.load %arg1[%c0, %c0_0] : memref<16x128xf32, #tpu.memory_space<vmem>>, vector<16x128xf32>
    %c0_1 = arith.constant 0 : index
    %c0_2 = arith.constant 0 : index
    %1 = vector.load %arg2[%c0_1, %c0_2] : memref<128x256xf32, #tpu.memory_space<vmem>>, vector<128x256xf32>
    %cst = arith.constant dense<0.000000e+00> : vector<16x256xf32>
    %2 = tpu.matmul %0, %1, %cst {dimension_numbers = #tpu.dot_dimension_numbers<[1], [0], [0], [1], [0, 0, 1, 1], [], []>} : vector<16x128xf32>, vector<128x256xf32>, vector<16x256xf32> -> vector<16x256xf32>
    %c0_3 = arith.constant 0 : index
    %c0_4 = arith.constant 0 : index
    %3 = vector.load %arg3[%c0_3, %c0_4] : memref<256x128xf32, #tpu.memory_space<vmem>>, vector<256x128xf32>
    %cst_5 = arith.constant dense<0.000000e+00> : vector<16x128xf32>
    %4 = tpu.matmul %2, %3, %cst_5 {dimension_numbers = #tpu.dot_dimension_numbers<[1], [0], [0], [1], [0, 0, 1, 1], [], []>} : vector<16x256xf32>, vector<256x128xf32>, vector<16x128xf32> -> vector<16x128xf32>
    %c0_6 = arith.constant 0 : index
    %c0_7 = arith.constant 0 : index
    %5 = vector.load %arg4[%c0_6, %c0_7] : memref<16x128xf32, #tpu.memory_space<vmem>>, vector<16x128xf32>
    tpu.vector_store %arg4[%c0_6, %c0_7], %4 {strides = array<i32>} : memref<16x128xf32, #tpu.memory_space<vmem>>, vector<16x128xf32>,
    return
  }
  func.func @transform_0(%arg0: i32) -> (i32, i32) {
    %c0_i32 = arith.constant 0 : i32
    %c0_i32_0 = arith.constant 0 : i32
    return %arg0, %c0_i32 : i32, i32
  }
  func.func @transform_1(%arg0: i32) -> (i32, i32) {
    %c0_i32 = arith.constant 0 : i32
    %c0_i32_0 = arith.constant 0 : i32
    %c0_i32_1 = arith.constant 0 : i32
    return %c0_i32, %c0_i32_0 : i32, i32
  }
  func.func @transform_2(%arg0: i32) -> (i32, i32) {
    %c0_i32 = arith.constant 0 : i32
    %c0_i32_0 = arith.constant 0 : i32
    %c0_i32_1 = arith.constant 0 : i32
    return %c0_i32, %c0_i32_0 : i32, i32
  }
  func.func @transform_3(%arg0: i32) -> (i32, i32) {
    %c0_i32 = arith.constant 0 : i32
    %c0_i32_0 = arith.constant 0 : i32
    return %arg0, %c0_i32 : i32, i32
  }
}

module attributes {stable_mosaic.version = 11 : i64} {
  func.func @_factorized_linear_kernel(%arg0: i32, %arg1: memref<16x128xf32, #tpu.memory_space<vmem>>, %arg2: memref<128x256xf32, #tpu.memory_space<vmem>>, %arg3: memref<256x128xf32, #tpu.memory_space<vmem>>, %arg4: memref<16x128xf32, #tpu.memory_space<vmem>>) attributes {dimension_semantics = [#tpu.dimension_semantics<parallel>], iteration_bounds = array<i64: 1>, scalar_prefetch = 0 : i64, scratch_operands = 0 : i64, tpu.core_type = #tpu.core_type<tc>, window_params = [{transform_indices = @transform_0, window_bounds = array<i64: 16, 128>}, {pipeline_mode = #tpu.pipeline_mode<synchronous>, transform_indices = @transform_1, window_bounds = array<i64: 128, 256>}, {pipeline_mode = #tpu.pipeline_mode<synchronous>, transform_indices = @transform_2, window_bounds = array<i64: 256, 128>}, {transform_indices = @transform_3, window_bounds = array<i64: 16, 128>}]} {
    %c0 = arith.constant 0 : index
    %c0_0 = arith.constant 0 : index
    %0 = vector.load %arg1[%c0, %c0_0] : memref<16x128xf32, #tpu.memory_space<vmem>>, vector<16x128xf32>
    %c0_1 = arith.constant 0 : index
    %c0_2 = arith.constant 0 : index
    %1 = vector.load %arg2[%c0_1, %c0_2] : memref<128x256xf32, #tpu.memory_space<vmem>>, vector<128x256xf32>
    %cst = arith.constant dense<0.000000e+00> : vector<16x256xf32>
    %2 = tpu.matmul %0, %1, %cst {dimension_numbers = #tpu.dot_dimension_numbers<[1], [0], [0], [1], [0, 0, 1, 1], [], []>} : vector<16x128xf32>, vector<128x256xf32>, vector<16x256xf32> -> vector<16x256xf32>
    %c0_3 = arith.constant 0 : index
    %c0_4 = arith.constant 0 : index
    %3 = vector.load %arg3[%c0_3, %c0_4] : memref<256x128xf32, #tpu.memory_space<vmem>>, vector<256x128xf32>
    %cst_5 = arith.constant dense<0.000000e+00> : vector<16x128xf32>
    %4 = tpu.matmul %2, %3, %cst_5 {dimension_numbers = #tpu.dot_dimension_numbers<[1], [0], [0], [1], [0, 0, 1, 1], [], []>} : vector<16x256xf32>, vector<256x128xf32>, vector<16x128xf32> -> vector<16x128xf32>
    %c0_6 = arith.constant 0 : index
    %c0_7 = arith.constant 0 : index
    %5 = vector.load %arg4[%c0_6, %c0_7] : memref<16x128xf32, #tpu.memory_space<vmem>>, vector<16x128xf32>
    tpu.vector_store %arg4[%c0_6, %c0_7], %4 {strides = array<i32>} : memref<16x128xf32, #tpu.memory_space<vmem>>, vector<16x128xf32>,
    return
  }
  func.func @transform_0(%arg0: i32) -> (i32, i32) {
    %c0_i32 = arith.constant 0 : i32
    %c0_i32_0 = arith.constant 0 : i32
    return %arg0, %c0_i32 : i32, i32
  }
  func.func @transform_1(%arg0: i32) -> (i32, i32) {
    %c0_i32 = arith.constant 0 : i32
    %c0_i32_0 = arith.constant 0 : i32
    %c0_i32_1 = arith.constant 0 : i32
    return %c0_i32, %c0_i32_0 : i32, i32
  }
  func.func @transform_2(%arg0: i32) -> (i32, i32) {
    %c0_i32 = arith.constant 0 : i32
    %c0_i32_0 = arith.constant 0 : i32
    %c0_i32_1 = arith.constant 0 : i32
    return %c0_i32, %c0_i32_0 : i32, i32
  }
  func.func @transform_3(%arg0: i32) -> (i32, i32) {
    %c0_i32 = arith.constant 0 : i32
    %c0_i32_0 = arith.constant 0 : i32
    return %arg0, %c0_i32 : i32, i32
  }
}

</mosaic_0001>

<llo_original>
// kernel: tpu_custom_call.1
$region0: #{tpu_custom_call.1}
  #allocation0 [shape = 'u32[]', space=smem, size = 0x4, offset = 0x4, fixed_abs, tag = 'smem constant byte address 0x4 - core index']
  #allocation1 [shape = 'u32[144,128]{1,0:T(1,128)}', space=vmem, size = 0x12000, scoped, tag = 'internal scratch']
  %s0 = inlined_call_operand.hbm [shape: f32[16,128], index: 0, kind: input, shape index: {}]
  %s1 = inlined_call_operand.hbm [shape: f32[128,256], index: 1, kind: input, shape index: {}]
  %s2 = inlined_call_operand.hbm [shape: f32[256,128], index: 2, kind: input, shape index: {}]
  %s3 = inlined_call_operand.hbm [shape: f32[16,128], index: 3, kind: output, shape index: {}]
  %s4 = sld [smem:[#allocation0]]
  $region34: #{tpu_custom_call.1} parent=0
    _
  %s6 = ssub.s32 1, %s4
  %s7 = scalar_select 0, %s6, %s4
  $region1: #{tpu_custom_call.1} parent=0
    #allocation2 [shape = 'u8[8192]{0}', space=vmem, size = 0x2000, scoped, tag = 'input window, operand 0, single buffered']
    #allocation3 [shape = 's32[1]{0}', space=sflag, size = 0x4, scoped, tag = 'scoped memory for tpu_custom_call.1']
    #allocation4 [shape = 's32[1]{0}', space=sflag, size = 0x4, scoped, tag = 'scoped memory for tpu_custom_call.1']
    #allocation5 [shape = 'u8[131072]{0}', space=vmem, size = 0x20000, scoped, tag = 'input window, operand 1, single buffered']
    #allocation6 [shape = 's32[1]{0}', space=sflag, size = 0x4, scoped, tag = 'scoped memory for tpu_custom_call.1']
    #allocation7 [shape = 'u8[131072]{0}', space=vmem, size = 0x20000, scoped, tag = 'input window, operand 2, single buffered']
    #allocation8 [shape = 'u8[8192]{0}', space=vmem, size = 0x2000, scoped, tag = 'output window, operand 0, single buffered']
    %8 = vsyncpa [#allocation3], 0
    %9 = vsyncpa [#allocation6], 0
    %10 = vsyncpa [#allocation4], 0
    // Predicated region
    $region2: #{tpu_custom_call.1} parent=1 // pred_check
      _
    $region3: #{tpu_custom_call.1} parent=1 // pred_check_branch
      %12 = sbr.rel (0) target = $region5
    $region4: #{tpu_custom_call.1} parent=1 // pred_region
      %s14 = ssub.s32 256, 256
      %15 = vsyncadd [#allocation3], %s14
      %s16 = sshll.u32 [#allocation2], 4
      %s17 = int_to_ptr.vmem [resolvable:$true] %s16
      %22 = dma.hbm_to_vmem [thread:$0]  %s0, 256, %s17, [#allocation3], 128, 128, 8
    $region5: #{tpu_custom_call.1} parent=1 // pred_fallthru
      _
    // Predicated region
    $region6: #{tpu_custom_call.1} parent=1 // pred_check
      _
    $region7: #{tpu_custom_call.1} parent=1 // pred_check_branch
      %24 = sbr.rel (0) target = $region9
    $region8: #{tpu_custom_call.1} parent=1 // pred_region
      %s26 = ssub.s32 4096, 4096
      %27 = vsyncadd [#allocation6], %s26
      %s28 = sshll.u32 [#allocation5], 4
      %s29 = int_to_ptr.vmem [resolvable:$true] %s28
      %34 = dma.hbm_to_vmem [thread:$0]  %s1, 4096, %s29, [#allocation6], 256, 256, 16
    $region9: #{tpu_custom_call.1} parent=1 // pred_fallthru
      _
    // Predicated region
    $region10: #{tpu_custom_call.1} parent=1 // pred_check
      _
    $region11: #{tpu_custom_call.1} parent=1 // pred_check_branch
      %36 = sbr.rel (0) target = $region13
    $region12: #{tpu_custom_call.1} parent=1 // pred_region
      %s38 = ssub.s32 4096, 4096
      %39 = vsyncadd [#allocation6], %s38
      %s40 = sshll.u32 [#allocation7], 4
      %s41 = int_to_ptr.vmem [resolvable:$true] %s40
      %46 = dma.hbm_to_vmem [thread:$0]  %s2, 4096, %s41, [#allocation6], 128, 128, 8
    $region13: #{tpu_custom_call.1} parent=1 // pred_fallthru
      _
    // Predicated region
    $region14: #{tpu_custom_call.1} parent=1 // pred_check
      _
    $region15: #{tpu_custom_call.1} parent=1 // pred_check_branch
      %48 = sbr.rel (0) target = $region17
    $region16: #{tpu_custom_call.1} parent=1 // pred_region
      %49 = dma.done [#allocation3], 256
    $region17: #{tpu_custom_call.1} parent=1 // pred_fallthru
      _
    // Predicated region
    $region18: #{tpu_custom_call.1} parent=1 // pred_check
      _
    $region19: #{tpu_custom_call.1} parent=1 // pred_check_branch
      %51 = sbr.rel (0) target = $region21
    $region20: #{tpu_custom_call.1} parent=1 // pred_region
      %52 = dma.done [#allocation6], 4096
    $region21: #{tpu_custom_call.1} parent=1 // pred_fallthru
      _
    // Predicated region
    $region22: #{tpu_custom_call.1} parent=1 // pred_check
      _
    $region23: #{tpu_custom_call.1} parent=1 // pred_check_branch
      %54 = sbr.rel (0) target = $region25
    $region24: #{tpu_custom_call.1} parent=1 // pred_region
      %55 = dma.done [#allocation6], 4096
    $region25: #{tpu_custom_call.1} parent=1 // pred_fallthru
      _
    %v56 = vld [vmem:[#allocation2] sm:$0xff]
    %v57 = vld [vmem:[#allocation2 + $0x8] sm:$0xff]
    %v58 = vld [vmem:[#allocation5] sm:$0xff]
    %v59 = vld [vmem:[#allocation5 + $0x8] sm:$0xff]
    %v60 = vld [vmem:[#allocation5 + $0x10] sm:$0xff]
    %v61 = vld [vmem:[#allocation5 + $0x18] sm:$0xff]
    %v62 = vld [vmem:[#allocation5 + $0x20] sm:$0xff]
    %v63 = vld [vmem:[#allocation5 + $0x28] sm:$0xff]
    %v64 = vld [vmem:[#allocation5 + $0x30] sm:$0xff]
    %v65 = vld [vmem:[#allocation5 + $0x38] sm:$0xff]
    %v66 = vld [vmem:[#allocation5 + $0x40] sm:$0xff]
    %v67 = vld [vmem:[#allocation5 + $0x48] sm:$0xff]
    %v68 = vld [vmem:[#allocation5 + $0x50] sm:$0xff]
    %v69 = vld [vmem:[#allocation5 + $0x58] sm:$0xff]
    %v70 = vld [vmem:[#allocation5 + $0x60] sm:$0xff]
    %v71 = vld [vmem:[#allocation5 + $0x68] sm:$0xff]
    %v72 = vld [vmem:[#allocation5 + $0x70] sm:$0xff]
    %v73 = vld [vmem:[#allocation5 + $0x78] sm:$0xff]
    %v74 = vld [vmem:[#allocation5 + $0x80] sm:$0xff]
    %v75 = vld [vmem:[#allocation5 + $0x88] sm:$0xff]
    %v76 = vld [vmem:[#allocation5 + $0x90] sm:$0xff]
    %v77 = vld [vmem:[#allocation5 + $0x98] sm:$0xff]
    %v78 = vld [vmem:[#allocation5 + $0xa0] sm:$0xff]
    %v79 = vld [vmem:[#allocation5 + $0xa8] sm:$0xff]
    %v80 = vld [vmem:[#allocation5 + $0xb0] sm:$0xff]
    %v81 = vld [vmem:[#allocation5 + $0xb8] sm:$0xff]
    %v82 = vld [vmem:[#allocation5 + $0xc0] sm:$0xff]
    %v83 = vld [vmem:[#allocation5 + $0xc8] sm:$0xff]
    %v84 = vld [vmem:[#allocation5 + $0xd0] sm:$0xff]
    %v85 = vld [vmem:[#allocation5 + $0xd8] sm:$0xff]
    %v86 = vld [vmem:[#allocation5 + $0xe0] sm:$0xff]
    %v87 = vld [vmem:[#allocation5 + $0xe8] sm:$0xff]
    %v88 = vld [vmem:[#allocation5 + $0xf0] sm:$0xff]
    %v89 = vld [vmem:[#allocation5 + $0xf8] sm:$0xff]
    %90 = vmatprep.subr.mxu0 %v89
    %91 = vmatpush1.msra.mxu0 %v88
    %92 = vmatprep.subr.mxu0 %v87
    %93 = vmatpush1.msra.mxu0 %v86
    %94 = vmatprep.subr.mxu0 %v85
    %95 = vmatpush1.msra.mxu0 %v84
    %96 = vmatprep.subr.mxu0 %v83
    %97 = vmatpush1.msra.mxu0 %v82
    %98 = vmatprep.subr.mxu0 %v81
    %99 = vmatpush1.msra.mxu0 %v80
    %100 = vmatprep.subr.mxu0 %v79
    %101 = vmatpush1.msra.mxu0 %v78
    %102 = vmatprep.subr.mxu0 %v77
    %103 = vmatpush1.msra.mxu0 %v76
    %104 = vmatprep.subr.mxu0 %v75
    %105 = vmatpush1.msra.mxu0 %v74
    %106 = vmatprep.subr.mxu0 %v73
    %107 = vmatpush1.msra.mxu0 %v72
    %108 = vmatprep.subr.mxu0 %v71
    %109 = vmatpush1.msra.mxu0 %v70
    %110 = vmatprep.subr.mxu0 %v69
    %111 = vmatpush1.msra.mxu0 %v68
    %112 = vmatprep.subr.mxu0 %v67
    %113 = vmatpush1.msra.mxu0 %v66
    %114 = vmatprep.subr.mxu0 %v65
    %115 = vmatpush1.msra.mxu0 %v64
    %116 = vmatprep.subr.mxu0 %v63
    %117 = vmatpush1.msra.mxu0 %v62
    %118 = vmatprep.subr.mxu0 %v61
    %119 = vmatpush1.msra.mxu0 %v60
    %120 = vmatprep.subr.mxu0 %v59
    %121 = vmatpush1.msra.mxu0 %v58
    %122 = vmatprep.subr.mxu0 0.0
    %123 = vmatpush2.msra.mxu0 0.0
    %124 = vmatprep.subr.mxu0 0.0
    %125 = vmatpush2.msra.mxu0 0.0
    %126 = vmatprep.subr.mxu0 0.0
    %127 = vmatpush2.msra.mxu0 0.0
    %128 = vmatprep.subr.mxu0 0.0
    %129 = vmatpush2.msra.mxu0 0.0
    %130 = vmatprep.subr.mxu0 0.0
    %131 = vmatpush2.msra.mxu0 0.0
    %132 = vmatprep.subr.mxu0 0.0
    %133 = vmatpush2.msra.mxu0 0.0
    %134 = vmatprep.subr.mxu0 0.0
    %135 = vmatpush2.msra.mxu0 0.0
    %136 = vmatprep.subr.mxu0 0.0
    %137 = vmatpush2.msra.mxu0 0.0
    %138 = vmatprep.subr.mxu0 0.0
    %139 = vmatpush2.msra.mxu0 0.0
    %140 = vmatprep.subr.mxu0 0.0
    %141 = vmatpush2.msra.mxu0 0.0
    %142 = vmatprep.subr.mxu0 0.0
    %143 = vmatpush2.msra.mxu0 0.0
    %144 = vmatprep.subr.mxu0 0.0
    %145 = vmatpush2.msra.mxu0 0.0
    %146 = vmatprep.subr.mxu0 0.0
    %147 = vmatpush2.msra.mxu0 0.0
    %148 = vmatprep.subr.mxu0 0.0
    %149 = vmatpush2.msra.mxu0 0.0
    %150 = vmatprep.subr.mxu0 0.0
    %151 = vmatpush2.msra.mxu0 0.0
    %152 = vmatprep.subr.mxu0 0.0
    %153 = vmatpush2.msra.mxu0 0.0
    %154 = vmatprep.mubr.f32.mxu0 0.0
    %155 = vmatmul.mubr.f32.gmra.mxu0 %v56
    %v156 = vpop.f32.mrf.mxu0
    %v157 = vadd.f32 0.0, %v156
    %v158 = vpop.f32.mrf.mxu0
    %v159 = vadd.f32 0.0, %v158
    %160 = vmatprep.mubr.f32.mxu0 0.0
    %161 = vmatmul.mubr.f32.gmra.mxu0 %v57
    %v162 = vpop.f32.mrf.mxu0
    %v163 = vadd.f32 0.0, %v162
    %v164 = vpop.f32.mrf.mxu0
    %v165 = vadd.f32 0.0, %v164
    %166 = vdwg.mxu0
    %v167 = vld [vmem:[#allocation7] sm:$0xff]
    %v168 = vld [vmem:[#allocation7 + $0x8] sm:$0xff]
    %v169 = vld [vmem:[#allocation7 + $0x10] sm:$0xff]
    %v170 = vld [vmem:[#allocation7 + $0x18] sm:$0xff]
    %v171 = vld [vmem:[#allocation7 + $0x20] sm:$0xff]
    %v172 = vld [vmem:[#allocation7 + $0x28] sm:$0xff]
    %v173 = vld [vmem:[#allocation7 + $0x30] sm:$0xff]
    %v174 = vld [vmem:[#allocation7 + $0x38] sm:$0xff]
    %v175 = vld [vmem:[#allocation7 + $0x40] sm:$0xff]
    %v176 = vld [vmem:[#allocation7 + $0x48] sm:$0xff]
    %v177 = vld [vmem:[#allocation7 + $0x50] sm:$0xff]
    %v178 = vld [vmem:[#allocation7 + $0x58] sm:$0xff]
    %v179 = vld [vmem:[#allocation7 + $0x60] sm:$0xff]
    %v180 = vld [vmem:[#allocation7 + $0x68] sm:$0xff]
    %v181 = vld [vmem:[#allocation7 + $0x70] sm:$0xff]
    %v182 = vld [vmem:[#allocation7 + $0x78] sm:$0xff]
    %v183 = vld [vmem:[#allocation7 + $0x80] sm:$0xff]
    %v184 = vld [vmem:[#allocation7 + $0x88] sm:$0xff]
    %v185 = vld [vmem:[#allocation7 + $0x90] sm:$0xff]
    %v186 = vld [vmem:[#allocation7 + $0x98] sm:$0xff]
    %v187 = vld [vmem:[#allocation7 + $0xa0] sm:$0xff]
    %v188 = vld [vmem:[#allocation7 + $0xa8] sm:$0xff]
    %v189 = vld [vmem:[#allocation7 + $0xb0] sm:$0xff]
    %v190 = vld [vmem:[#allocation7 + $0xb8] sm:$0xff]
    %v191 = vld [vmem:[#allocation7 + $0xc0] sm:$0xff]
    %v192 = vld [vmem:[#allocation7 + $0xc8] sm:$0xff]
    %v193 = vld [vmem:[#allocation7 + $0xd0] sm:$0xff]
    %v194 = vld [vmem:[#allocation7 + $0xd8] sm:$0xff]
    %v195 = vld [vmem:[#allocation7 + $0xe0] sm:$0xff]
    %v196 = vld [vmem:[#allocation7 + $0xe8] sm:$0xff]
    %v197 = vld [vmem:[#allocation7 + $0xf0] sm:$0xff]
    %v198 = vld [vmem:[#allocation7 + $0xf8] sm:$0xff]
    %199 = vmatprep.subr.mxu0 0.0
    %200 = vmatpush1.msra.mxu0 %v182
    %201 = vmatprep.subr.mxu0 0.0
    %202 = vmatpush1.msra.mxu0 %v181
    %203 = vmatprep.subr.mxu0 0.0
    %204 = vmatpush1.msra.mxu0 %v180
    %205 = vmatprep.subr.mxu0 0.0
    %206 = vmatpush1.msra.mxu0 %v179
    %207 = vmatprep.subr.mxu0 0.0
    %208 = vmatpush1.msra.mxu0 %v178
    %209 = vmatprep.subr.mxu0 0.0
    %210 = vmatpush1.msra.mxu0 %v177
    %211 = vmatprep.subr.mxu0 0.0
    %212 = vmatpush1.msra.mxu0 %v176
    %213 = vmatprep.subr.mxu0 0.0
    %214 = vmatpush1.msra.mxu0 %v175
    %215 = vmatprep.subr.mxu0 0.0
    %216 = vmatpush1.msra.mxu0 %v174
    %217 = vmatprep.subr.mxu0 0.0
    %218 = vmatpush1.msra.mxu0 %v173
    %219 = vmatprep.subr.mxu0 0.0
    %220 = vmatpush1.msra.mxu0 %v172
    %221 = vmatprep.subr.mxu0 0.0
    %222 = vmatpush1.msra.mxu0 %v171
    %223 = vmatprep.subr.mxu0 0.0
    %224 = vmatpush1.msra.mxu0 %v170
    %225 = vmatprep.subr.mxu0 0.0
    %226 = vmatpush1.msra.mxu0 %v169
    %227 = vmatprep.subr.mxu0 0.0
    %228 = vmatpush1.msra.mxu0 %v168
    %229 = vmatprep.subr.mxu0 0.0
    %230 = vmatpush1.msra.mxu0 %v167
    %231 = vmatprep.subr.mxu0 0.0
    %232 = vmatpush2.msra.mxu0 %v198
    %233 = vmatprep.subr.mxu0 0.0
    %234 = vmatpush2.msra.mxu0 %v197
    %235 = vmatprep.subr.mxu0 0.0
    %236 = vmatpush2.msra.mxu0 %v196
    %237 = vmatprep.subr.mxu0 0.0
    %238 = vmatpush2.msra.mxu0 %v195
    %239 = vmatprep.subr.mxu0 0.0
    %240 = vmatpush2.msra.mxu0 %v194
    %241 = vmatprep.subr.mxu0 0.0
    %242 = vmatpush2.msra.mxu0 %v193
    %243 = vmatprep.subr.mxu0 0.0
    %244 = vmatpush2.msra.mxu0 %v192
    %245 = vmatprep.subr.mxu0 0.0
    %246 = vmatpush2.msra.mxu0 %v191
    %247 = vmatprep.subr.mxu0 0.0
    %248 = vmatpush2.msra.mxu0 %v190
    %249 = vmatprep.subr.mxu0 0.0
    %250 = vmatpush2.msra.mxu0 %v189
    %251 = vmatprep.subr.mxu0 0.0
    %252 = vmatpush2.msra.mxu0 %v188
    %253 = vmatprep.subr.mxu0 0.0
    %254 = vmatpush2.msra.mxu0 %v187
    %255 = vmatprep.subr.mxu0 0.0
    %256 = vmatpush2.msra.mxu0 %v186
    %257 = vmatprep.subr.mxu0 0.0
    %258 = vmatpush2.msra.mxu0 %v185
    %259 = vmatprep.subr.mxu0 0.0
    %260 = vmatpush2.msra.mxu0 %v184
    %261 = vmatprep.subr.mxu0 0.0
    %262 = vmatpush2.msra.mxu0 %v183
    %263 = vmatprep.mubr.f32.mxu0 %v159
    %264 = vmatmul.mubr.f32.gmra.mxu0 %v157
    %v265 = vpop.f32.mrf.mxu0
    %v266 = vadd.f32 0.0, %v265
    %v267 = vpop.f32.mrf.mxu0
    %268 = vmatprep.mubr.f32.mxu0 %v165
    %269 = vmatmul.mubr.f32.gmra.mxu0 %v163
    %v270 = vpop.f32.mrf.mxu0
    %v271 = vadd.f32 0.0, %v270
    %v272 = vpop.f32.mrf.mxu0
    %273 = vdwg.mxu0
    %274 = vst [vmem:[#allocation8] sm:$0xff] %v266
    %275 = vst [vmem:[#allocation8 + $0x8] sm:$0xff] %v271
    // Predicated region
    $region26: #{tpu_custom_call.1} parent=1 // pred_check
      _
    $region27: #{tpu_custom_call.1} parent=1 // pred_check_branch
      %277 = sbr.rel (0) target = $region29
    $region28: #{tpu_custom_call.1} parent=1 // pred_region
      %s279 = ssub.s32 256, 256
      %280 = vsyncadd [#allocation4], %s279
      %s281 = sshll.u32 [#allocation8], 4
      %s282 = int_to_ptr.vmem [resolvable:$true] %s281
      %287 = dma.vmem_to_hbm [thread:$0]  %s282, 256, %s3, [#allocation4], 128, 128, 8
    $region29: #{tpu_custom_call.1} parent=1 // pred_fallthru
      _
    // Predicated region
    $region30: #{tpu_custom_call.1} parent=1 // pred_check
      _
    $region31: #{tpu_custom_call.1} parent=1 // pred_check_branch
      %289 = sbr.rel (0) target = $region33
    $region32: #{tpu_custom_call.1} parent=1 // pred_region
      %290 = dma.done [#allocation4], 256
    $region33: #{tpu_custom_call.1} parent=1 // pred_fallthru
      _
    %291 = vsyncpa [#allocation3], 1
    %292 = vsyncpa [#allocation6], 1
    %293 = vsyncpa [#allocation4], 1

// kernel: tpu_custom_call.1
$region0: #{tpu_custom_call.1}
  #allocation0 [shape = 'u32[]', space=smem, size = 0x4, offset = 0x4, fixed_abs, tag = 'smem constant byte address 0x4 - core index']
  #allocation1 [shape = 'u32[144,128]{1,0:T(1,128)}', space=vmem, size = 0x12000, scoped, tag = 'internal scratch']
  %s0 = inlined_call_operand.hbm [shape: f32[16,128], index: 0, kind: input, shape index: {}]
  %s1 = inlined_call_operand.hbm [shape: f32[128,256], index: 1, kind: input, shape index: {}]
  %s2 = inlined_call_operand.hbm [shape: f32[256,128], index: 2, kind: input, shape index: {}]
  %s3 = inlined_call_operand.hbm [shape: f32[16,128], index: 3, kind: output, shape index: {}]
  %s4 = sld [smem:[#allocation0]]
  $region34: #{tpu_custom_call.1} parent=0
    _
  %s6 = ssub.s32 1, %s4
  %s7 = scalar_select 0, %s6, %s4
  $region1: #{tpu_custom_call.1} parent=0
    #allocation2 [shape = 'u8[8192]{0}', space=vmem, size = 0x2000, scoped, tag = 'input window, operand 0, single buffered']
    #allocation3 [shape = 's32[1]{0}', space=sflag, size = 0x4, scoped, tag = 'scoped memory for tpu_custom_call.1']
    #allocation4 [shape = 's32[1]{0}', space=sflag, size = 0x4, scoped, tag = 'scoped memory for tpu_custom_call.1']
    #allocation5 [shape = 'u8[131072]{0}', space=vmem, size = 0x20000, scoped, tag = 'input window, operand 1, single buffered']
    #allocation6 [shape = 's32[1]{0}', space=sflag, size = 0x4, scoped, tag = 'scoped memory for tpu_custom_call.1']
    #allocation7 [shape = 'u8[131072]{0}', space=vmem, size = 0x20000, scoped, tag = 'input window, operand 2, single buffered']
    #allocation8 [shape = 'u8[8192]{0}', space=vmem, size = 0x2000, scoped, tag = 'output window, operand 0, single buffered']
    %8 = vsyncpa [#allocation3], 0
    %9 = vsyncpa [#allocation6], 0
    %10 = vsyncpa [#allocation4], 0
    // Predicated region
    $region2: #{tpu_custom_call.1} parent=1 // pred_check
      _
    $region3: #{tpu_custom_call.1} parent=1 // pred_check_branch
      %12 = sbr.rel (0) target = $region5
    $region4: #{tpu_custom_call.1} parent=1 // pred_region
      %s14 = ssub.s32 256, 256
      %15 = vsyncadd [#allocation3], %s14
      %s16 = sshll.u32 [#allocation2], 4
      %s17 = int_to_ptr.vmem [resolvable:$true] %s16
      %22 = dma.hbm_to_vmem [thread:$0]  %s0, 256, %s17, [#allocation3], 128, 128, 8
    $region5: #{tpu_custom_call.1} parent=1 // pred_fallthru
      _
    // Predicated region
    $region6: #{tpu_custom_call.1} parent=1 // pred_check
      _
    $region7: #{tpu_custom_call.1} parent=1 // pred_check_branch
      %24 = sbr.rel (0) target = $region9
    $region8: #{tpu_custom_call.1} parent=1 // pred_region
      %s26 = ssub.s32 4096, 4096
      %27 = vsyncadd [#allocation6], %s26
      %s28 = sshll.u32 [#allocation5], 4
      %s29 = int_to_ptr.vmem [resolvable:$true] %s28
      %34 = dma.hbm_to_vmem [thread:$0]  %s1, 4096, %s29, [#allocation6], 256, 256, 16
    $region9: #{tpu_custom_call.1} parent=1 // pred_fallthru
      _
    // Predicated region
    $region10: #{tpu_custom_call.1} parent=1 // pred_check
      _
    $region11: #{tpu_custom_call.1} parent=1 // pred_check_branch
      %36 = sbr.rel (0) target = $region13
    $region12: #{tpu_custom_call.1} parent=1 // pred_region
      %s38 = ssub.s32 4096, 4096
      %39 = vsyncadd [#allocation6], %s38
      %s40 = sshll.u32 [#allocation7], 4
      %s41 = int_to_ptr.vmem [resolvable:$true] %s40
      %46 = dma.hbm_to_vmem [thread:$0]  %s2, 4096, %s41, [#allocation6], 128, 128, 8
    $region13: #{tpu_custom_call.1} parent=1 // pred_fallthru
      _
    // Predicated region
    $region14: #{tpu_custom_call.1} parent=1 // pred_check
      _
    $region15: #{tpu_custom_call.1} parent=1 // pred_check_branch
      %48 = sbr.rel (0) target = $region17
    $region16: #{tpu_custom_call.1} parent=1 // pred_region
      %49 = dma.done [#allocation3], 256
    $region17: #{tpu_custom_call.1} parent=1 // pred_fallthru
      _
    // Predicated region
    $region18: #{tpu_custom_call.1} parent=1 // pred_check
      _
    $region19: #{tpu_custom_call.1} parent=1 // pred_check_branch
      %51 = sbr.rel (0) target = $region21
    $region20: #{tpu_custom_call.1} parent=1 // pred_region
      %52 = dma.done [#allocation6], 4096
    $region21: #{tpu_custom_call.1} parent=1 // pred_fallthru
      _
    // Predicated region
    $region22: #{tpu_custom_call.1} parent=1 // pred_check
      _
    $region23: #{tpu_custom_call.1} parent=1 // pred_check_branch
      %54 = sbr.rel (0) target = $region25
    $region24: #{tpu_custom_call.1} parent=1 // pred_region
      %55 = dma.done [#allocation6], 4096
    $region25: #{tpu_custom_call.1} parent=1 // pred_fallthru
      _
    %v56 = vld [vmem:[#allocation2] sm:$0xff]
    %v57 = vld [vmem:[#allocation2 + $0x8] sm:$0xff]
    %v58 = vld [vmem:[#allocation5] sm:$0xff]
    %v59 = vld [vmem:[#allocation5 + $0x8] sm:$0xff]
    %v60 = vld [vmem:[#allocation5 + $0x10] sm:$0xff]
    %v61 = vld [vmem:[#allocation5 + $0x18] sm:$0xff]
    %v62 = vld [vmem:[#allocation5 + $0x20] sm:$0xff]
    %v63 = vld [vmem:[#allocation5 + $0x28] sm:$0xff]
    %v64 = vld [vmem:[#allocation5 + $0x30] sm:$0xff]
    %v65 = vld [vmem:[#allocation5 + $0x38] sm:$0xff]
    %v66 = vld [vmem:[#allocation5 + $0x40] sm:$0xff]
    %v67 = vld [vmem:[#allocation5 + $0x48] sm:$0xff]
    %v68 = vld [vmem:[#allocation5 + $0x50] sm:$0xff]
    %v69 = vld [vmem:[#allocation5 + $0x58] sm:$0xff]
    %v70 = vld [vmem:[#allocation5 + $0x60] sm:$0xff]
    %v71 = vld [vmem:[#allocation5 + $0x68] sm:$0xff]
    %v72 = vld [vmem:[#allocation5 + $0x70] sm:$0xff]
    %v73 = vld [vmem:[#allocation5 + $0x78] sm:$0xff]
    %v74 = vld [vmem:[#allocation5 + $0x80] sm:$0xff]
    %v75 = vld [vmem:[#allocation5 + $0x88] sm:$0xff]
    %v76 = vld [vmem:[#allocation5 + $0x90] sm:$0xff]
    %v77 = vld [vmem:[#allocation5 + $0x98] sm:$0xff]
    %v78 = vld [vmem:[#allocation5 + $0xa0] sm:$0xff]
    %v79 = vld [vmem:[#allocation5 + $0xa8] sm:$0xff]
    %v80 = vld [vmem:[#allocation5 + $0xb0] sm:$0xff]
    %v81 = vld [vmem:[#allocation5 + $0xb8] sm:$0xff]
    %v82 = vld [vmem:[#allocation5 + $0xc0] sm:$0xff]
    %v83 = vld [vmem:[#allocation5 + $0xc8] sm:$0xff]
    %v84 = vld [vmem:[#allocation5 + $0xd0] sm:$0xff]
    %v85 = vld [vmem:[#allocation5 + $0xd8] sm:$0xff]
    %v86 = vld [vmem:[#allocation5 + $0xe0] sm:$0xff]
    %v87 = vld [vmem:[#allocation5 + $0xe8] sm:$0xff]
    %v88 = vld [vmem:[#allocation5 + $0xf0] sm:$0xff]
    %v89 = vld [vmem:[#allocation5 + $0xf8] sm:$0xff]
    %90 = vmatprep.subr.mxu0 %v89
    %91 = vmatpush1.msra.mxu0 %v88
    %92 = vmatprep.subr.mxu0 %v87
    %93 = vmatpush1.msra.mxu0 %v86
    %94 = vmatprep.subr.mxu0 %v85
    %95 = vmatpush1.msra.mxu0 %v84
    %96 = vmatprep.subr.mxu0 %v83
    %97 = vmatpush1.msra.mxu0 %v82
    %98 = vmatprep.subr.mxu0 %v81
    %99 = vmatpush1.msra.mxu0 %v80
    %100 = vmatprep.subr.mxu0 %v79
    %101 = vmatpush1.msra.mxu0 %v78
    %102 = vmatprep.subr.mxu0 %v77
    %103 = vmatpush1.msra.mxu0 %v76
    %104 = vmatprep.subr.mxu0 %v75
    %105 = vmatpush1.msra.mxu0 %v74
    %106 = vmatprep.subr.mxu0 %v73
    %107 = vmatpush1.msra.mxu0 %v72
    %108 = vmatprep.subr.mxu0 %v71
    %109 = vmatpush1.msra.mxu0 %v70
    %110 = vmatprep.subr.mxu0 %v69
    %111 = vmatpush1.msra.mxu0 %v68
    %112 = vmatprep.subr.mxu0 %v67
    %113 = vmatpush1.msra.mxu0 %v66
    %114 = vmatprep.subr.mxu0 %v65
    %115 = vmatpush1.msra.mxu0 %v64
    %116 = vmatprep.subr.mxu0 %v63
    %117 = vmatpush1.msra.mxu0 %v62
    %118 = vmatprep.subr.mxu0 %v61
    %119 = vmatpush1.msra.mxu0 %v60
    %120 = vmatprep.subr.mxu0 %v59
    %121 = vmatpush1.msra.mxu0 %v58
    %122 = vmatprep.subr.mxu0 0.0
    %123 = vmatpush2.msra.mxu0 0.0
    %124 = vmatprep.subr.mxu0 0.0
    %125 = vmatpush2.msra.mxu0 0.0
    %126 = vmatprep.subr.mxu0 0.0
    %127 = vmatpush2.msra.mxu0 0.0
    %128 = vmatprep.subr.mxu0 0.0
    %129 = vmatpush2.msra.mxu0 0.0
    %130 = vmatprep.subr.mxu0 0.0
    %131 = vmatpush2.msra.mxu0 0.0
    %132 = vmatprep.subr.mxu0 0.0
    %133 = vmatpush2.msra.mxu0 0.0
    %134 = vmatprep.subr.mxu0 0.0
    %135 = vmatpush2.msra.mxu0 0.0
    %136 = vmatprep.subr.mxu0 0.0
    %137 = vmatpush2.msra.mxu0 0.0
    %138 = vmatprep.subr.mxu0 0.0
    %139 = vmatpush2.msra.mxu0 0.0
    %140 = vmatprep.subr.mxu0 0.0
    %141 = vmatpush2.msra.mxu0 0.0
    %142 = vmatprep.subr.mxu0 0.0
    %143 = vmatpush2.msra.mxu0 0.0
    %144 = vmatprep.subr.mxu0 0.0
    %145 = vmatpush2.msra.mxu0 0.0
    %146 = vmatprep.subr.mxu0 0.0
    %147 = vmatpush2.msra.mxu0 0.0
    %148 = vmatprep.subr.mxu0 0.0
    %149 = vmatpush2.msra.mxu0 0.0
    %150 = vmatprep.subr.mxu0 0.0
    %151 = vmatpush2.msra.mxu0 0.0
    %152 = vmatprep.subr.mxu0 0.0
    %153 = vmatpush2.msra.mxu0 0.0
    %154 = vmatprep.mubr.f32.mxu0 0.0
    %155 = vmatmul.mubr.f32.gmra.mxu0 %v56
    %v156 = vpop.f32.mrf.mxu0
    %v157 = vadd.f32 0.0, %v156
    %v158 = vpop.f32.mrf.mxu0
    %v159 = vadd.f32 0.0, %v158
    %160 = vmatprep.mubr.f32.mxu0 0.0
    %161 = vmatmul.mubr.f32.gmra.mxu0 %v57
    %v162 = vpop.f32.mrf.mxu0
    %v163 = vadd.f32 0.0, %v162
    %v164 = vpop.f32.mrf.mxu0
    %v165 = vadd.f32 0.0, %v164
    %166 = vdwg.mxu0
    %v167 = vld [vmem:[#allocation7] sm:$0xff]
    %v168 = vld [vmem:[#allocation7 + $0x8] sm:$0xff]
    %v169 = vld [vmem:[#allocation7 + $0x10] sm:$0xff]
    %v170 = vld [vmem:[#allocation7 + $0x18] sm:$0xff]
    %v171 = vld [vmem:[#allocation7 + $0x20] sm:$0xff]
    %v172 = vld [vmem:[#allocation7 + $0x28] sm:$0xff]
    %v173 = vld [vmem:[#allocation7 + $0x30] sm:$0xff]
    %v174 = vld [vmem:[#allocation7 + $0x38] sm:$0xff]
    %v175 = vld [vmem:[#allocation7 + $0x40] sm:$0xff]
    %v176 = vld [vmem:[#allocation7 + $0x48] sm:$0xff]
    %v177 = vld [vmem:[#allocation7 + $0x50] sm:$0xff]
    %v178 = vld [vmem:[#allocation7 + $0x58] sm:$0xff]
    %v179 = vld [vmem:[#allocation7 + $0x60] sm:$0xff]
    %v180 = vld [vmem:[#allocation7 + $0x68] sm:$0xff]
    %v181 = vld [vmem:[#allocation7 + $0x70] sm:$0xff]
    %v182 = vld [vmem:[#allocation7 + $0x78] sm:$0xff]
    %v183 = vld [vmem:[#allocation7 + $0x80] sm:$0xff]
    %v184 = vld [vmem:[#allocation7 + $0x88] sm:$0xff]
    %v185 = vld [vmem:[#allocation7 + $0x90] sm:$0xff]
    %v186 = vld [vmem:[#allocation7 + $0x98] sm:$0xff]
    %v187 = vld [vmem:[#allocation7 + $0xa0] sm:$0xff]
    %v188 = vld [vmem:[#allocation7 + $0xa8] sm:$0xff]
    %v189 = vld [vmem:[#allocation7 + $0xb0] sm:$0xff]
    %v190 = vld [vmem:[#allocation7 + $0xb8] sm:$0xff]
    %v191 = vld [vmem:[#allocation7 + $0xc0] sm:$0xff]
    %v192 = vld [vmem:[#allocation7 + $0xc8] sm:$0xff]
    %v193 = vld [vmem:[#allocation7 + $0xd0] sm:$0xff]
    %v194 = vld [vmem:[#allocation7 + $0xd8] sm:$0xff]
    %v195 = vld [vmem:[#allocation7 + $0xe0] sm:$0xff]
    %v196 = vld [vmem:[#allocation7 + $0xe8] sm:$0xff]
    %v197 = vld [vmem:[#allocation7 + $0xf0] sm:$0xff]
    %v198 = vld [vmem:[#allocation7 + $0xf8] sm:$0xff]
    %199 = vmatprep.subr.mxu0 0.0
    %200 = vmatpush1.msra.mxu0 %v182
    %201 = vmatprep.subr.mxu0 0.0
    %202 = vmatpush1.msra.mxu0 %v181
    %203 = vmatprep.subr.mxu0 0.0
    %204 = vmatpush1.msra.mxu0 %v180
    %205 = vmatprep.subr.mxu0 0.0
    %206 = vmatpush1.msra.mxu0 %v179
    %207 = vmatprep.subr.mxu0 0.0
    %208 = vmatpush1.msra.mxu0 %v178
    %209 = vmatprep.subr.mxu0 0.0
    %210 = vmatpush1.msra.mxu0 %v177
    %211 = vmatprep.subr.mxu0 0.0
    %212 = vmatpush1.msra.mxu0 %v176
    %213 = vmatprep.subr.mxu0 0.0
    %214 = vmatpush1.msra.mxu0 %v175
    %215 = vmatprep.subr.mxu0 0.0
    %216 = vmatpush1.msra.mxu0 %v174
    %217 = vmatprep.subr.mxu0 0.0
    %218 = vmatpush1.msra.mxu0 %v173
    %219 = vmatprep.subr.mxu0 0.0
    %220 = vmatpush1.msra.mxu0 %v172
    %221 = vmatprep.subr.mxu0 0.0
    %222 = vmatpush1.msra.mxu0 %v171
    %223 = vmatprep.subr.mxu0 0.0
    %224 = vmatpush1.msra.mxu0 %v170
    %225 = vmatprep.subr.mxu0 0.0
    %226 = vmatpush1.msra.mxu0 %v169
    %227 = vmatprep.subr.mxu0 0.0
    %228 = vmatpush1.msra.mxu0 %v168
    %229 = vmatprep.subr.mxu0 0.0
    %230 = vmatpush1.msra.mxu0 %v167
    %231 = vmatprep.subr.mxu0 0.0
    %232 = vmatpush2.msra.mxu0 %v198
    %233 = vmatprep.subr.mxu0 0.0
    %234 = vmatpush2.msra.mxu0 %v197
    %235 = vmatprep.subr.mxu0 0.0
    %236 = vmatpush2.msra.mxu0 %v196
    %237 = vmatprep.subr.mxu0 0.0
    %238 = vmatpush2.msra.mxu0 %v195
    %239 = vmatprep.subr.mxu0 0.0
    %240 = vmatpush2.msra.mxu0 %v194
    %241 = vmatprep.subr.mxu0 0.0
    %242 = vmatpush2.msra.mxu0 %v193
    %243 = vmatprep.subr.mxu0 0.0
    %244 = vmatpush2.msra.mxu0 %v192
    %245 = vmatprep.subr.mxu0 0.0
    %246 = vmatpush2.msra.mxu0 %v191
    %247 = vmatprep.subr.mxu0 0.0
    %248 = vmatpush2.msra.mxu0 %v190
    %249 = vmatprep.subr.mxu0 0.0
    %250 = vmatpush2.msra.mxu0 %v189
    %251 = vmatprep.subr.mxu0 0.0
    %252 = vmatpush2.msra.mxu0 %v188
    %253 = vmatprep.subr.mxu0 0.0
    %254 = vmatpush2.msra.mxu0 %v187
    %255 = vmatprep.subr.mxu0 0.0
    %256 = vmatpush2.msra.mxu0 %v186
    %257 = vmatprep.subr.mxu0 0.0
    %258 = vmatpush2.msra.mxu0 %v185
    %259 = vmatprep.subr.mxu0 0.0
    %260 = vmatpush2.msra.mxu0 %v184
    %261 = vmatprep.subr.mxu0 0.0
    %262 = vmatpush2.msra.mxu0 %v183
    %263 = vmatprep.mubr.f32.mxu0 %v159
    %264 = vmatmul.mubr.f32.gmra.mxu0 %v157
    %v265 = vpop.f32.mrf.mxu0
    %v266 = vadd.f32 0.0, %v265
    %v267 = vpop.f32.mrf.mxu0
    %268 = vmatprep.mubr.f32.mxu0 %v165
    %269 = vmatmul.mubr.f32.gmra.mxu0 %v163
    %v270 = vpop.f32.mrf.mxu0
    %v271 = vadd.f32 0.0, %v270
    %v272 = vpop.f32.mrf.mxu0
    %273 = vdwg.mxu0
    %274 = vst [vmem:[#allocation8] sm:$0xff] %v266
    %275 = vst [vmem:[#allocation8 + $0x8] sm:$0xff] %v271
    // Predicated region
    $region26: #{tpu_custom_call.1} parent=1 // pred_check
      _
    $region27: #{tpu_custom_call.1} parent=1 // pred_check_branch
      %277 = sbr.rel (0) target = $region29
    $region28: #{tpu_custom_call.1} parent=1 // pred_region
      %s279 = ssub.s32 256, 256
      %280 = vsyncadd [#allocation4], %s279
      %s281 = sshll.u32 [#allocation8], 4
      %s282 = int_to_ptr.vmem [resolvable:$true] %s281
      %287 = dma.vmem_to_hbm [thread:$0]  %s282, 256, %s3, [#allocation4], 128, 128, 8
    $region29: #{tpu_custom_call.1} parent=1 // pred_fallthru
      _
    // Predicated region
    $region30: #{tpu_custom_call.1} parent=1 // pred_check
      _
    $region31: #{tpu_custom_call.1} parent=1 // pred_check_branch
      %289 = sbr.rel (0) target = $region33
    $region32: #{tpu_custom_call.1} parent=1 // pred_region
      %290 = dma.done [#allocation4], 256
    $region33: #{tpu_custom_call.1} parent=1 // pred_fallthru
      _
    %291 = vsyncpa [#allocation3], 1
    %292 = vsyncpa [#allocation6], 1
    %293 = vsyncpa [#allocation4], 1

</llo_original>
